<compile_context>
chip_gen: v7x
topology: tpu7x:2x2x1
jax: 0.10.0
libtpu: 0.0.40
codegen_flags: <defaults>
</compile_context>

<pallas_src>
import math

import jax
import jax.numpy as jnp
from jax.experimental import pallas as pl
from jax.experimental.pallas import tpu as pltpu


# ~1 MiB per streamed block: measured f32-add tile sweep on v6e puts ~1 MiB tiles at ~85% of
# HBM roofline; keeps the double-buffered footprint under every chip's default scoped VMEM.
_TARGET_BLOCK_BYTES = 1 << 20


def make_positional_encoding(d_model: int, max_len: int = 5000, dtype=jnp.float32):
    """Deterministic parameter setup, mirrors PositionalEncoding.__init__ exactly."""
    position = jnp.arange(0, max_len, dtype=jnp.float32)[:, None]          # (max_len, 1)
    div_term = jnp.exp(
        jnp.arange(0, d_model, 2, dtype=jnp.float32) * -(math.log(10000.0) / d_model)
    )                                                                       # (d_model/2,)
    angles = position * div_term                                            # (max_len, d/2)
    enc = jnp.zeros((max_len, d_model), dtype=jnp.float32)
    enc = enc.at[:, 0::2].set(jnp.sin(angles))
    enc = enc.at[:, 1::2].set(jnp.cos(angles))
    return enc.astype(dtype)                                                # (max_len, d)


def _add_kernel(x_ref, pe_ref, o_ref):
    # Pure elementwise add. pe_ref either matches x_ref's block exactly (seq-tiled path,
    # batch squeezed) or broadcasts over the sublane/batch axis ((1, TC) in the flat path).
    o_ref[...] = x_ref[...] + pe_ref[...]


def _forward_seq_tiled(x, pe, cost):
    """D is a multiple of 128: keep D on the lane axis, tile S, squeeze the batch dim."""
    B, S, D = x.shape
    itemsize = jnp.dtype(x.dtype).itemsize
    ts = max(8, min(S, _TARGET_BLOCK_BYTES // (D * itemsize)))
    ts = min(S, (ts // 8) * 8)                      # multiple of 8 sublanes (or full S)
    grid = (pl.cdiv(S, ts), B)                      # batch innermost: pe block index is
                                                    # unchanged across it -> fetched once/tile
    return pl.pallas_call(
        _add_kernel,
        out_shape=jax.ShapeDtypeStruct((B, S, D), x.dtype),
        grid_spec=pltpu.PrefetchScalarGridSpec(
            num_scalar_prefetch=0,
            grid=grid,
            in_specs=[
                pl.BlockSpec((pl.Squeezed(), ts, D), lambda s, b: (b, s, 0)),
                # TODO(synk): pl.Buffered(1) on this invariant PE block would reclaim its
                # second buffer; left at the default for maximally portable compilation.
                pl.BlockSpec((ts, D), lambda s, b: (s, 0)),
            ],
            out_specs=pl.BlockSpec((pl.Squeezed(), ts, D), lambda s, b: (b, s, 0)),
        ),
        compiler_params=pltpu.CompilerParams(
            dimension_semantics=("parallel", "parallel"),
        ),
        cost_estimate=cost,
    )(x, pe)


def _forward_flattened(x, pe, cost):
    """Small / non-128-multiple D: flatten (S, D) so the lane axis can be a 128-multiple."""
    B, S, D = x.shape
    N = S * D
    itemsize = jnp.dtype(x.dtype).itemsize
    x2 = x.reshape(B, N)
    pe2 = pe.reshape(1, N)                          # broadcast over batch preserved
    if N <= 128:
        tc = N                                      # full-dim block (always legal)
    else:
        tc = (_TARGET_BLOCK_BYTES // (B * itemsize) // 128) * 128
        tc = min(N, max(128, tc))                   # lane-dense multiple of 128
    grid = (pl.cdiv(N, tc),)
    out = pl.pallas_call(
        _add_kernel,
        out_shape=jax.ShapeDtypeStruct((B, N), x.dtype),
        grid_spec=pltpu.PrefetchScalarGridSpec(
            num_scalar_prefetch=0,
            grid=grid,
            in_specs=[
                pl.BlockSpec((B, tc), lambda c: (0, c)),
                pl.BlockSpec((1, tc), lambda c: (0, c)),
            ],
            out_specs=pl.BlockSpec((B, tc), lambda c: (0, c)),
        ),
        compiler_params=pltpu.CompilerParams(
            dimension_semantics=("parallel",),
        ),
        cost_estimate=cost,
    )(x2, pe2)
    return out.reshape(B, S, D)


def positional_encoding_forward(x: jax.Array, encoding: jax.Array) -> jax.Array:
    """x: (B, S, D); encoding: (max_len, D). Returns x + encoding[:S] broadcast over batch."""
    B, S, D = x.shape
    # Slice to the current sequence length and cast once to the activation dtype
    # (avoids an in-kernel up/down-cast and halves the PE HBM stream for bf16 activations).
    pe = encoding[:S, :].astype(x.dtype)
    itemsize = jnp.dtype(x.dtype).itemsize
    cost = pl.CostEstimate(
        flops=B * S * D,
        transcendentals=0,
        bytes_accessed=(2 * B * S * D + S * D) * itemsize,
    )
    if D % 128 == 0 and 8 * D * itemsize <= _TARGET_BLOCK_BYTES:
        return _forward_seq_tiled(x, pe, cost)
    return _forward_flattened(x, pe, cost)


if __name__ == "__main__":
    key = jax.random.PRNGKey(0)

    # Case 1: small demo shape (d_model=32 -> flattened lane-dense path).
    B, S, D = 2, 8, 32
    enc = make_positional_encoding(D, max_len=64)
    x = jax.random.normal(key, (B, S, D), dtype=jnp.float32)
    out = jax.block_until_ready(positional_encoding_forward(x, enc))
    ref = x + enc[None, :S, :]
    assert out.shape == (B, S, D)
    assert jnp.allclose(out, ref, atol=1e-6, rtol=1e-6)

    # Case 2: d_model multiple of 128 -> sequence-tiled (batch-squeezed) path.
    B2, S2, D2 = 2, 16, 128
    enc2 = make_positional_encoding(D2, max_len=32)
    x2 = jax.random.normal(jax.random.fold_in(key, 1), (B2, S2, D2), dtype=jnp.float32)
    out2 = jax.block_until_ready(positional_encoding_forward(x2, enc2))
    ref2 = x2 + enc2[None, :S2, :]
    assert out2.shape == (B2, S2, D2)
    assert jnp.allclose(out2, ref2, atol=1e-6, rtol=1e-6)

    print("KERNEL_OK")
</pallas_src>

<mosaic_0001>
module attributes {stable_mosaic.version = 11 : i64} {
  func.func @_add_kernel(%arg0: i32, %arg1: memref<2x256xf32, #tpu.memory_space<vmem>>, %arg2: memref<1x256xf32, #tpu.memory_space<vmem>>, %arg3: memref<2x256xf32, #tpu.memory_space<vmem>>) attributes {dimension_semantics = [#tpu.dimension_semantics<parallel>], iteration_bounds = array<i64: 1>, scalar_prefetch = 0 : i64, scratch_operands = 0 : i64, tpu.core_type = #tpu.core_type<tc>, window_params = [{transform_indices = @transform_0, window_bounds = array<i64: 2, 256>}, {transform_indices = @transform_1, window_bounds = array<i64: 1, 256>}, {transform_indices = @transform_2, window_bounds = array<i64: 2, 256>}]} {
    %c0 = arith.constant 0 : index
    %c0_0 = arith.constant 0 : index
    %0 = vector.load %arg1[%c0, %c0_0] : memref<2x256xf32, #tpu.memory_space<vmem>>, vector<2x256xf32>
    %c0_1 = arith.constant 0 : index
    %c0_2 = arith.constant 0 : index
    %1 = vector.load %arg2[%c0_1, %c0_2] : memref<1x256xf32, #tpu.memory_space<vmem>>, vector<1x256xf32>
    %2 = vector.broadcast %1 : vector<1x256xf32> to vector<2x256xf32>
    %3 = arith.addf %0, %2 : vector<2x256xf32>
    %c0_3 = arith.constant 0 : index
    %c0_4 = arith.constant 0 : index
    %4 = vector.load %arg3[%c0_3, %c0_4] : memref<2x256xf32, #tpu.memory_space<vmem>>, vector<2x256xf32>
    tpu.vector_store %arg3[%c0_3, %c0_4], %3 {strides = array<i32>} : memref<2x256xf32, #tpu.memory_space<vmem>>, vector<2x256xf32>,
    return
  }
  func.func @transform_0(%arg0: i32) -> (i32, i32) {
    %c0_i32 = arith.constant 0 : i32
    %c0_i32_0 = arith.constant 0 : i32
    return %c0_i32, %arg0 : i32, i32
  }
  func.func @transform_1(%arg0: i32) -> (i32, i32) {
    %c0_i32 = arith.constant 0 : i32
    %c0_i32_0 = arith.constant 0 : i32
    return %c0_i32, %arg0 : i32, i32
  }
  func.func @transform_2(%arg0: i32) -> (i32, i32) {
    %c0_i32 = arith.constant 0 : i32
    %c0_i32_0 = arith.constant 0 : i32
    return %c0_i32, %arg0 : i32, i32
  }
}

</mosaic_0001>

<llo_original>
// kernel: tpu_custom_call.1
$region0: #{tpu_custom_call.1}
  #allocation0 [shape = 'u32[]', space=smem, size = 0x4, offset = 0x4, fixed_abs, tag = 'smem constant byte address 0x4 - core index']
  #allocation1 [shape = 'u32[144,128]{1,0:T(1,128)}', space=vmem, size = 0x12000, scoped, tag = 'internal scratch']
  %s0 = inlined_call_operand.hbm [shape: f32[2,256], index: 0, kind: input, shape index: {}]
  %s1 = inlined_call_operand.vmem [shape: f32[1,256], index: 1, kind: input, shape index: {}]
  %s2 = inlined_call_operand.hbm [shape: f32[2,256], index: 2, kind: output, shape index: {}]
  %s3 = sld [smem:[#allocation0]]
  $region22: #{tpu_custom_call.1} parent=0
    _
  %s5 = ssub.s32 1, %s3
  %s6 = scalar_select 0, %s5, %s3
  $region1: #{tpu_custom_call.1} parent=0
    #allocation2 [shape = 'u8[2048]{0}', space=vmem, size = 0x800, scoped, tag = 'input window, operand 0, single buffered']
    #allocation3 [shape = 's32[1]{0}', space=sflag, size = 0x4, scoped, tag = 'scoped memory for tpu_custom_call.1']
    #allocation4 [shape = 's32[1]{0}', space=sflag, size = 0x4, scoped, tag = 'scoped memory for tpu_custom_call.1']
    #allocation5 [shape = 'u8[2048]{0}', space=vmem, size = 0x800, scoped, tag = 'output window, operand 0, single buffered']
    %7 = vsyncpa [#allocation3], 0
    %8 = vsyncpa [#allocation4], 0
    // Predicated region
    $region2: #{tpu_custom_call.1} parent=1 // pred_check
      _
    $region3: #{tpu_custom_call.1} parent=1 // pred_check_branch
      %10 = sbr.rel (0) target = $region5
    $region4: #{tpu_custom_call.1} parent=1 // pred_region
      %s12 = ssub.s32 64, 64
      %13 = vsyncadd [#allocation3], %s12
      %s15 = sshll.u32 [#allocation2], 4
      %s16 = int_to_ptr.vmem [resolvable:$true] %s15
      %18 = dma.hbm_to_vmem [thread:$0]  %s0, 64, %s16, [#allocation3]
    $region5: #{tpu_custom_call.1} parent=1 // pred_fallthru
      _
    // Predicated region
    $region6: #{tpu_custom_call.1} parent=1 // pred_check
      _
    $region7: #{tpu_custom_call.1} parent=1 // pred_check_branch
      %20 = sbr.rel (0) target = $region9
    $region8: #{tpu_custom_call.1} parent=1 // pred_region
      _
    $region9: #{tpu_custom_call.1} parent=1 // pred_fallthru
      _
    // Predicated region
    $region10: #{tpu_custom_call.1} parent=1 // pred_check
      _
    $region11: #{tpu_custom_call.1} parent=1 // pred_check_branch
      %22 = sbr.rel (0) target = $region13
    $region12: #{tpu_custom_call.1} parent=1 // pred_region
      %23 = dma.done [#allocation3], 64
    $region13: #{tpu_custom_call.1} parent=1 // pred_fallthru
      _
    %v24 = vld [vmem:[#allocation2] sm:$0xf]
    %v25 = vld [vmem:[%s1] sm:$0x3]
    %v27 = vlaneseq
    %v28 = vshrl.u32 %v27, 7
    %v29 = vsub.s32 0, %v28
    %v30 = vrot.slane %v25, %v29
    %v31 = vlaneseq
    %v32 = vshrl.u32 %v31, 7
    %v33 = vsub.s32 1, %v32
    %v34 = vrot.slane %v25, %v33
    %v35 = vcombine.low %v30, %v34
    %v37 = vunpack.c.l.s4 1983009808
    %v38 = vunpack.c.0.s8 %v37
    %v39 = vlaneseq
    %v40 = vshrl.u32 %v39, 7
    %v41 = vsub.s32 %v38, %v40
    %v42 = vrot.slane %v35, %v41
    %v44 = vadd.f32 %v24, %v42
    %45 = vst [vmem:[#allocation5] sm:$0xf] %v44
    // Predicated region
    $region14: #{tpu_custom_call.1} parent=1 // pred_check
      _
    $region15: #{tpu_custom_call.1} parent=1 // pred_check_branch
      %47 = sbr.rel (0) target = $region17
    $region16: #{tpu_custom_call.1} parent=1 // pred_region
      %s49 = ssub.s32 64, 64
      %50 = vsyncadd [#allocation4], %s49
      %s52 = sshll.u32 [#allocation5], 4
      %s53 = int_to_ptr.vmem [resolvable:$true] %s52
      %55 = dma.vmem_to_hbm [thread:$0]  %s53, 64, %s2, [#allocation4]
    $region17: #{tpu_custom_call.1} parent=1 // pred_fallthru
      _
    // Predicated region
    $region18: #{tpu_custom_call.1} parent=1 // pred_check
      _
    $region19: #{tpu_custom_call.1} parent=1 // pred_check_branch
      %57 = sbr.rel (0) target = $region21
    $region20: #{tpu_custom_call.1} parent=1 // pred_region
      %58 = dma.done [#allocation4], 64
    $region21: #{tpu_custom_call.1} parent=1 // pred_fallthru
      _
    %59 = vsyncpa [#allocation3], 1
    %60 = vsyncpa [#allocation4], 1

</llo_original>
